<compile_context>
chip_gen: v7x
topology: tpu7x:2x2x1
jax: 0.10.0
libtpu: 0.0.40
codegen_flags: <defaults>
</compile_context>

<pallas_src>
import jax
import jax.numpy as jnp
from jax.experimental import pallas as pl
from jax.experimental.pallas import tpu as pltpu


_LANE = 128      # tile quantum for multi-block grids (multiple of 8/16 sublanes)
_SMALL = 512     # at or below this many rows, use a single block


# --------------------------------------------------------------------------- #
# Kernel
# --------------------------------------------------------------------------- #
def _make_token_conf_kernel(n_desc: int):
    """Fused kernel over `n_desc` descriptor tensors sharing one 1-D grid.

    Ref order: (w_hi, w_lo, bias, x_0..x_{n-1}, o_0..o_{n-1})
      w_hi, w_lo : (8, D) bf16 hi/lo split of the Linear weight row, replicated
                   over 8 sublanes, resident (constant index_map).
      bias       : (1,)   f32 scalar in SMEM.
      x_i        : (tm, D) descriptor tile.
      o_i        : (1, tm) lane-dense confidence row.
    """
    dims = (((1,), (1,)), ((), ()))   # contract last dims: W(8,D) . X(tm,D)^T

    def kernel(*refs):
        w_hi_ref, w_lo_ref, b_ref = refs[0], refs[1], refs[2]
        x_refs = refs[3:3 + n_desc]
        o_refs = refs[3 + n_desc:]

        w_hi = w_hi_ref[...]          # (8, D) bf16
        w_lo = w_lo_ref[...]          # (8, D) bf16
        bias = b_ref[0]               # scalar f32 from SMEM

        for x_ref, o_ref in zip(x_refs, o_refs):
            x = x_ref[...].astype(jnp.float32)                    # (tm, D)
            # hi/lo bf16 split -> exact-in-operands MXU matmuls, f32 accumulate.
            x_hi = x.astype(jnp.bfloat16)
            x_lo = (x - x_hi.astype(jnp.float32)).astype(jnp.bfloat16)
            acc = jax.lax.dot_general(w_hi, x_hi, dims,
                                      preferred_element_type=jnp.float32)
            acc = acc + jax.lax.dot_general(w_lo, x_hi, dims,
                                            preferred_element_type=jnp.float32)
            acc = acc + jax.lax.dot_general(w_hi, x_lo, dims,
                                            preferred_element_type=jnp.float32)
            # (8, tm) all-equal rows -> take one row -> lane-dense epilogue.
            logits = acc[0:1, :] + bias                           # (1, tm)
            o_ref[...] = jax.nn.sigmoid(logits).astype(o_ref.dtype)

    return kernel


# --------------------------------------------------------------------------- #
# Tiling helpers
# --------------------------------------------------------------------------- #
def _pick_tile(m: int, d: int, itemsize: int, target: int = 2048) -> int:
    """Row-tile size: large (amortize ~0.35us/step), lane/sublane friendly,
    balanced so the grid has an even number of comparable steps (v7x megacore),
    and capped so double-buffered inputs stay well inside scoped VMEM."""
    if m <= _SMALL:
        return pl.cdiv(m, 16) * 16                 # single (possibly ragged) block
    # Cap: 2 tensors x 2 pipeline buffers of (tm, D) input tiles <= ~24 MiB.
    cap = (24 << 20) // max(1, 4 * d * itemsize)
    cap = max(_LANE, (cap // _LANE) * _LANE)
    target = max(_LANE, min(int(target), cap))
    nblocks = pl.cdiv(m, target)
    nblocks += nblocks % 2                          # even number of grid steps
    tm = pl.cdiv(pl.cdiv(m, nblocks), _LANE) * _LANE
    return tm


def _vmem_limit_bytes(tm: int, d: int, itemsizes) -> int:
    in_b = sum(2 * tm * d * it for it in itemsizes)   # double-buffered x tiles
    out_b = sum(2 * tm * it for it in itemsizes)      # double-buffered out rows
    w_b = 2 * 2 * 8 * d * 2                           # two (8, D) bf16 weights
    need = in_b + out_b + w_b + (4 << 20)             # + internal-scratch slack
    return int(min(max(32 << 20, need), 48 << 20))


# --------------------------------------------------------------------------- #
# pallas_call wrapper
# --------------------------------------------------------------------------- #
def _run_fused(x_list, w_hi8, w_lo8, b_vec, tm):
    """x_list: list of (M, D) arrays (same M).  Returns list of (1, G*tm)."""
    m, d = x_list[0].shape
    g = pl.cdiv(m, tm)

    in_specs = [
        pl.BlockSpec((8, d), lambda i: (0, 0)),                 # w_hi (resident)
        pl.BlockSpec((8, d), lambda i: (0, 0)),                 # w_lo (resident)
        pl.BlockSpec(memory_space=pltpu.MemorySpace.SMEM),      # bias scalar
    ] + [pl.BlockSpec((tm, d), lambda i: (i, 0)) for _ in x_list]
    out_specs = [pl.BlockSpec((1, tm), lambda i: (0, i)) for _ in x_list]
    out_shape = [jax.ShapeDtypeStruct((1, g * tm), x.dtype) for x in x_list]

    outs = pl.pallas_call(
        _make_token_conf_kernel(len(x_list)),
        out_shape=out_shape,
        grid=(g,),
        in_specs=in_specs,
        out_specs=out_specs,
        compiler_params=pltpu.CompilerParams(
            dimension_semantics=("parallel",),
            vmem_limit_bytes=_vmem_limit_bytes(
                tm, d, [x.dtype.itemsize for x in x_list]),
        ),
    )(w_hi8, w_lo8, b_vec, *x_list)

    if not isinstance(outs, (list, tuple)):
        outs = (outs,)
    return list(outs)


def token_confidence(desc0, desc1, w, b, *, tm_target: int = 2048):
    """Pallas equivalent of TokenConfidence.forward.

    desc0, desc1 : (..., D) descriptors (typically (B, N, D)); token counts and
                   dtypes may differ between the two.
    w            : Linear weight, any of (D, 1) / (1, D) / (D,).
    b            : Linear bias (scalar / (1,) / (1, 1)).
    Returns the two confidence arrays with the descriptors' leading shapes.
    """
    w_row = jnp.asarray(w, jnp.float32).reshape(1, -1)          # (1, D) f32
    d = w_row.shape[1]
    b_vec = jnp.asarray(b, jnp.float32).reshape(-1)[:1]         # (1,)  f32

    # Host-side hi/lo bf16 split of the weight, replicated over 8 sublanes.
    w_hi = w_row.astype(jnp.bfloat16)
    w_lo = (w_row - w_hi.astype(jnp.float32)).astype(jnp.bfloat16)
    w_hi8 = jnp.broadcast_to(w_hi, (8, d))
    w_lo8 = jnp.broadcast_to(w_lo, (8, d))

    # TODO(synk): lane-pack k = 128 // D tokens per row when D < 128
    # (irrelevant for LightGlue's D = 256).

    shapes = (desc0.shape[:-1], desc1.shape[:-1])
    x0 = desc0.reshape(-1, d)
    x1 = desc1.reshape(-1, d)
    m0, m1 = x0.shape[0], x1.shape[0]

    # One fused launch even for mismatched token counts: zero-pad the shorter
    # descriptor (cheap vs. a second kernel launch).  Padded rows only land in
    # output columns that are sliced off below.
    m = max(m0, m1)
    if m0 < m:
        x0 = jnp.pad(x0, ((0, m - m0), (0, 0)))
    if m1 < m:
        x1 = jnp.pad(x1, ((0, m - m1), (0, 0)))

    itemsize = max(x0.dtype.itemsize, x1.dtype.itemsize)
    tm = _pick_tile(m, d, itemsize, tm_target)

    o0, o1 = _run_fused([x0, x1], w_hi8, w_lo8, b_vec, tm)
    c0 = o0[0, :m0].reshape(shapes[0])
    c1 = o1[0, :m1].reshape(shapes[1])
    return c0, c1


def init_params(dim: int, key: jax.Array):
    """Deterministic Linear(dim, 1) parameters (mimics torch default init range)."""
    kw, kb = jax.random.split(key)
    bound = 1.0 / jnp.sqrt(jnp.float32(dim))
    w = jax.random.uniform(kw, (dim, 1), jnp.float32, -bound, bound)
    b = jax.random.uniform(kb, (1, 1), jnp.float32, -bound, bound)
    return w, b


# --------------------------------------------------------------------------- #
# Demo / self-check
# --------------------------------------------------------------------------- #
if __name__ == "__main__":
    key = jax.random.PRNGKey(0)
    k0, k1, k2, k3, k4, k5, kp = jax.random.split(key, 7)

    D = 256                      # LightGlue descriptor dimension
    w, b = init_params(D, kp)

    def ref_conf(desc):
        # Exact f32 elementwise reference (avoids XLA's default matmul precision).
        w32 = jnp.asarray(w, jnp.float32).reshape(-1)
        b32 = jnp.asarray(b, jnp.float32).reshape(-1)[0]
        logits = jnp.sum(desc.astype(jnp.float32) * w32, axis=-1) + b32
        return jax.nn.sigmoid(logits)

    # ---- Test 1: small matched shapes (single fused launch, one grid step) --
    B, N = 2, 8
    desc0 = jax.random.normal(k0, (B, N, D), jnp.float32)
    desc1 = jax.random.normal(k1, (B, N, D), jnp.float32)
    c0, c1 = token_confidence(desc0, desc1, w, b)
    jax.block_until_ready((c0, c1))
    assert c0.shape == (B, N) and c1.shape == (B, N)
    assert jnp.allclose(c0, ref_conf(desc0), atol=1e-4), "fused desc0 mismatch"
    assert jnp.allclose(c1, ref_conf(desc1), atol=1e-4), "fused desc1 mismatch"

    # ---- Test 2: mismatched token counts (shorter padded, still one launch) --
    d0b = jax.random.normal(k2, (1, 37, D), jnp.float32)
    d1b = jax.random.normal(k3, (1, 20, D), jnp.float32)
    c0b, c1b = token_confidence(d0b, d1b, w, b)
    jax.block_until_ready((c0b, c1b))
    assert c0b.shape == (1, 37) and c1b.shape == (1, 20)
    assert jnp.allclose(c0b, ref_conf(d0b), atol=1e-4), "padded desc0 mismatch"
    assert jnp.allclose(c1b, ref_conf(d1b), atol=1e-4), "padded desc1 mismatch"

    # ---- Test 3: multi-block balanced grid, ragged last block, mixed dtypes --
    d0c = jax.random.normal(k4, (1, 1200, D), jnp.float32)
    d1c = jax.random.normal(k5, (1, 900, D), jnp.bfloat16)
    c0c, c1c = token_confidence(d0c, d1c, w, b)
    jax.block_until_ready((c0c, c1c))
    assert c0c.shape == (1, 1200) and c1c.shape == (1, 900)
    assert jnp.allclose(c0c, ref_conf(d0c), atol=1e-4), "tiled desc0 mismatch"
    # bf16 output quantization dominates the tolerance here.
    assert jnp.allclose(c1c.astype(jnp.float32), ref_conf(d1c), atol=5e-3), \
        "tiled bf16 desc1 mismatch"

    print("KERNEL_OK")
</pallas_src>

<mosaic_0001>
module attributes {stable_mosaic.version = 11 : i64} {
  func.func @kernel(%arg0: i32, %arg1: memref<8x256xbf16, #tpu.memory_space<vmem>>, %arg2: memref<8x256xbf16, #tpu.memory_space<vmem>>, %arg3: memref<1xf32, #tpu.memory_space<smem>>, %arg4: memref<16x256xf32, #tpu.memory_space<vmem>>, %arg5: memref<16x256xf32, #tpu.memory_space<vmem>>, %arg6: memref<1x16xf32, #tpu.memory_space<vmem>>, %arg7: memref<1x16xf32, #tpu.memory_space<vmem>>) attributes {dimension_semantics = [#tpu.dimension_semantics<parallel>], iteration_bounds = array<i64: 1>, scalar_prefetch = 0 : i64, scratch_operands = 0 : i64, tpu.core_type = #tpu.core_type<tc>, window_params = [{pipeline_mode = #tpu.pipeline_mode<synchronous>, transform_indices = @transform_0, window_bounds = array<i64: 8, 256>}, {pipeline_mode = #tpu.pipeline_mode<synchronous>, transform_indices = @transform_1, window_bounds = array<i64: 8, 256>}, {transform_indices = @transform_2, window_bounds = array<i64: 1>}, {transform_indices = @transform_3, window_bounds = array<i64: 16, 256>}, {transform_indices = @transform_4, window_bounds = array<i64: 16, 256>}, {transform_indices = @transform_5, window_bounds = array<i64: 1, 16>}, {transform_indices = @transform_6, window_bounds = array<i64: 1, 16>}]} {
    %c0 = arith.constant 0 : index
    %c0_0 = arith.constant 0 : index
    %0 = vector.load %arg1[%c0, %c0_0] : memref<8x256xbf16, #tpu.memory_space<vmem>>, vector<8x256xbf16>
    %c0_1 = arith.constant 0 : index
    %c0_2 = arith.constant 0 : index
    %1 = vector.load %arg2[%c0_1, %c0_2] : memref<8x256xbf16, #tpu.memory_space<vmem>>, vector<8x256xbf16>
    %c0_3 = arith.constant 0 : index
    %2 = memref.load %arg3[%c0_3] : memref<1xf32, #tpu.memory_space<smem>>
    %c0_4 = arith.constant 0 : index
    %c0_5 = arith.constant 0 : index
    %3 = vector.load %arg4[%c0_4, %c0_5] : memref<16x256xf32, #tpu.memory_space<vmem>>, vector<16x256xf32>
    %4 = arith.truncf %3 : vector<16x256xf32> to vector<16x256xbf16>
    %5 = arith.extf %4 : vector<16x256xbf16> to vector<16x256xf32>
    %6 = arith.subf %3, %5 : vector<16x256xf32>
    %7 = arith.truncf %6 : vector<16x256xf32> to vector<16x256xbf16>
    %cst = arith.constant dense<0.000000e+00> : vector<8x16xf32>
    %8 = tpu.matmul %0, %4, %cst {dimension_numbers = #tpu.dot_dimension_numbers<[1], [1], [0], [0], [0, 0, 1, 0], [], []>} : vector<8x256xbf16>, vector<16x256xbf16>, vector<8x16xf32> -> vector<8x16xf32>
    %cst_6 = arith.constant dense<0.000000e+00> : vector<8x16xf32>
    %9 = tpu.matmul %1, %4, %cst_6 {dimension_numbers = #tpu.dot_dimension_numbers<[1], [1], [0], [0], [0, 0, 1, 0], [], []>} : vector<8x256xbf16>, vector<16x256xbf16>, vector<8x16xf32> -> vector<8x16xf32>
    %10 = arith.addf %8, %9 : vector<8x16xf32>
    %cst_7 = arith.constant dense<0.000000e+00> : vector<8x16xf32>
    %11 = tpu.matmul %0, %7, %cst_7 {dimension_numbers = #tpu.dot_dimension_numbers<[1], [1], [0], [0], [0, 0, 1, 0], [], []>} : vector<8x256xbf16>, vector<16x256xbf16>, vector<8x16xf32> -> vector<8x16xf32>
    %12 = arith.addf %10, %11 : vector<8x16xf32>
    %13 = vector.extract_strided_slice %12 {offsets = [0, 0], sizes = [1, 16], strides = [1, 1]} : vector<8x16xf32> to vector<1x16xf32>
    %14 = vector.broadcast %2 : f32 to vector<1x16xf32>
    %15 = arith.addf %13, %14 : vector<1x16xf32>
    %16 = arith.negf %15 : vector<1x16xf32>
    %17 = math.exp %16 : vector<1x16xf32>
    %cst_8 = arith.constant 1.000000e+00 : f32
    %18 = vector.broadcast %cst_8 : f32 to vector<1x16xf32>
    %19 = arith.addf %18, %17 : vector<1x16xf32>
    %20 = arith.divf %18, %19 : vector<1x16xf32>
    %c0_9 = arith.constant 0 : index
    %c0_10 = arith.constant 0 : index
    %21 = vector.load %arg6[%c0_9, %c0_10] : memref<1x16xf32, #tpu.memory_space<vmem>>, vector<1x16xf32>
    tpu.vector_store %arg6[%c0_9, %c0_10], %20 {strides = array<i32>} : memref<1x16xf32, #tpu.memory_space<vmem>>, vector<1x16xf32>,
    %c0_11 = arith.constant 0 : index
    %c0_12 = arith.constant 0 : index
    %22 = vector.load %arg5[%c0_11, %c0_12] : memref<16x256xf32, #tpu.memory_space<vmem>>, vector<16x256xf32>
    %23 = arith.truncf %22 : vector<16x256xf32> to vector<16x256xbf16>
    %24 = arith.extf %23 : vector<16x256xbf16> to vector<16x256xf32>
    %25 = arith.subf %22, %24 : vector<16x256xf32>
    %26 = arith.truncf %25 : vector<16x256xf32> to vector<16x256xbf16>
    %cst_13 = arith.constant dense<0.000000e+00> : vector<8x16xf32>
    %27 = tpu.matmul %0, %23, %cst_13 {dimension_numbers = #tpu.dot_dimension_numbers<[1], [1], [0], [0], [0, 0, 1, 0], [], []>} : vector<8x256xbf16>, vector<16x256xbf16>, vector<8x16xf32> -> vector<8x16xf32>
    %cst_14 = arith.constant dense<0.000000e+00> : vector<8x16xf32>
    %28 = tpu.matmul %1, %23, %cst_14 {dimension_numbers = #tpu.dot_dimension_numbers<[1], [1], [0], [0], [0, 0, 1, 0], [], []>} : vector<8x256xbf16>, vector<16x256xbf16>, vector<8x16xf32> -> vector<8x16xf32>
    %29 = arith.addf %27, %28 : vector<8x16xf32>
    %cst_15 = arith.constant dense<0.000000e+00> : vector<8x16xf32>
    %30 = tpu.matmul %0, %26, %cst_15 {dimension_numbers = #tpu.dot_dimension_numbers<[1], [1], [0], [0], [0, 0, 1, 0], [], []>} : vector<8x256xbf16>, vector<16x256xbf16>, vector<8x16xf32> -> vector<8x16xf32>
    %31 = arith.addf %29, %30 : vector<8x16xf32>
    %32 = vector.extract_strided_slice %31 {offsets = [0, 0], sizes = [1, 16], strides = [1, 1]} : vector<8x16xf32> to vector<1x16xf32>
    %33 = vector.broadcast %2 : f32 to vector<1x16xf32>
    %34 = arith.addf %32, %33 : vector<1x16xf32>
    %35 = arith.negf %34 : vector<1x16xf32>
    %36 = math.exp %35 : vector<1x16xf32>
    %cst_16 = arith.constant 1.000000e+00 : f32
    %37 = vector.broadcast %cst_16 : f32 to vector<1x16xf32>
    %38 = arith.addf %37, %36 : vector<1x16xf32>
    %39 = arith.divf %37, %38 : vector<1x16xf32>
    %c0_17 = arith.constant 0 : index
    %c0_18 = arith.constant 0 : index
    %40 = vector.load %arg7[%c0_17, %c0_18] : memref<1x16xf32, #tpu.memory_space<vmem>>, vector<1x16xf32>
    tpu.vector_store %arg7[%c0_17, %c0_18], %39 {strides = array<i32>} : memref<1x16xf32, #tpu.memory_space<vmem>>, vector<1x16xf32>,
    return
  }
  func.func @transform_0(%arg0: i32) -> (i32, i32) {
    %c0_i32 = arith.constant 0 : i32
    %c0_i32_0 = arith.constant 0 : i32
    %c0_i32_1 = arith.constant 0 : i32
    return %c0_i32, %c0_i32_0 : i32, i32
  }
  func.func @transform_1(%arg0: i32) -> (i32, i32) {
    %c0_i32 = arith.constant 0 : i32
    %c0_i32_0 = arith.constant 0 : i32
    %c0_i32_1 = arith.constant 0 : i32
    return %c0_i32, %c0_i32_0 : i32, i32
  }
  func.func @transform_2(%arg0: i32) -> i32 {
    %c0_i32 = arith.constant 0 : i32
    %c0_i32_0 = arith.constant 0 : i32
    return %c0_i32 : i32
  }
  func.func @transform_3(%arg0: i32) -> (i32, i32) {
    %c0_i32 = arith.constant 0 : i32
    %c0_i32_0 = arith.constant 0 : i32
    return %arg0, %c0_i32 : i32, i32
  }
  func.func @transform_4(%arg0: i32) -> (i32, i32) {
    %c0_i32 = arith.constant 0 : i32
    %c0_i32_0 = arith.constant 0 : i32
    return %arg0, %c0_i32 : i32, i32
  }
  func.func @transform_5(%arg0: i32) -> (i32, i32) {
    %c0_i32 = arith.constant 0 : i32
    %c0_i32_0 = arith.constant 0 : i32
    return %c0_i32, %arg0 : i32, i32
  }
  func.func @transform_6(%arg0: i32) -> (i32, i32) {
    %c0_i32 = arith.constant 0 : i32
    %c0_i32_0 = arith.constant 0 : i32
    return %c0_i32, %arg0 : i32, i32
  }
}

</mosaic_0001>

<llo_original>
// kernel: tpu_custom_call.1
$region0: #{tpu_custom_call.1}
  #allocation0 [shape = 'u32[]', space=smem, size = 0x4, offset = 0x4, fixed_abs, tag = 'smem constant byte address 0x4 - core index']
  #allocation1 [shape = 'u32[144,128]{1,0:T(1,128)}', space=vmem, size = 0x12000, scoped, tag = 'internal scratch']
  #allocation2 [shape = 'f32[1]{0:T(128)S(6)}', space=smem, size = 0x200, scoped, tag = 'scoped memory for tpu_custom_call.1']
  %s0 = inlined_call_operand.hbm [shape: bf16[8,256], index: 0, kind: input, shape index: {}]
  %s1 = inlined_call_operand.hbm [shape: bf16[8,256], index: 1, kind: input, shape index: {}]
  %s2 = inlined_call_operand.<no memory space> [shape: f32[1], index: 2, kind: input, shape index: {}]
  %s3 = inlined_call_operand.hbm [shape: f32[16,256], index: 3, kind: input, shape index: {}]
  %s4 = inlined_call_operand.hbm [shape: f32[16,256], index: 4, kind: input, shape index: {}]
  %s5 = inlined_call_operand.hbm [shape: f32[1,16], index: 5, kind: output, shape index: {0}]
  %s6 = inlined_call_operand.hbm [shape: f32[1,16], index: 6, kind: output, shape index: {1}]
  %7 = xla_tuple %s5, %s6
  %s8 = sld [smem:[#allocation0]]
  $region54: #{tpu_custom_call.1} parent=0
    _
  %s10 = ssub.s32 1, %s8
  %s11 = scalar_select 0, %s10, %s8
  %12 = sst [smem:[#allocation2]] %s2
  $region1: #{tpu_custom_call.1} parent=0
    #allocation3 [shape = 'u8[4096]{0}', space=vmem, size = 0x1000, scoped, tag = 'input window, operand 0, single buffered']
    #allocation4 [shape = 's32[1]{0}', space=sflag, size = 0x4, scoped, tag = 'scoped memory for tpu_custom_call.1']
    #allocation5 [shape = 's32[1]{0}', space=sflag, size = 0x4, scoped, tag = 'scoped memory for tpu_custom_call.1']
    #allocation6 [shape = 'u8[4096]{0}', space=vmem, size = 0x1000, scoped, tag = 'input window, operand 1, single buffered']
    #allocation7 [shape = 's32[1]{0}', space=sflag, size = 0x4, scoped, tag = 'scoped memory for tpu_custom_call.1']
    #allocation8 [shape = 'u8[16384]{0}', space=vmem, size = 0x4000, scoped, tag = 'input window, operand 3, single buffered']
    #allocation9 [shape = 'u8[16384]{0}', space=vmem, size = 0x4000, scoped, tag = 'input window, operand 4, single buffered']
    #allocation10 [shape = 's32[1]{0}', space=sflag, size = 0x4, scoped, tag = 'scoped memory for tpu_custom_call.1']
    #allocation11 [shape = 'u8[512]{0}', space=vmem, size = 0x400, scoped, tag = 'output window, operand 0, single buffered']
    #allocation12 [shape = 'u8[512]{0}', space=vmem, size = 0x400, scoped, tag = 'output window, operand 1, single buffered']
    #allocation13 [shape = 's32[1]{0}', space=sflag, size = 0x4, scoped, tag = 'scoped memory for tpu_custom_call.1']
    %13 = vsyncpa [#allocation4], 0
    %14 = vsyncpa [#allocation7], 0
    %15 = vsyncpa [#allocation10], 0
    %16 = vsyncpa [#allocation5], 0
    %17 = vsyncpa [#allocation13], 0
    // Predicated region
    $region2: #{tpu_custom_call.1} parent=1 // pred_check
      _
    $region3: #{tpu_custom_call.1} parent=1 // pred_check_branch
      %19 = sbr.rel (0) target = $region5
    $region4: #{tpu_custom_call.1} parent=1 // pred_region
      %s21 = ssub.s32 128, 128
      %22 = vsyncadd [#allocation4], %s21
      %s24 = sshll.u32 [#allocation3], 4
      %s25 = int_to_ptr.vmem [resolvable:$true] %s24
      %27 = dma.hbm_to_vmem [thread:$0]  %s0, 128, %s25, [#allocation4]
    $region5: #{tpu_custom_call.1} parent=1 // pred_fallthru
      _
    // Predicated region
    $region6: #{tpu_custom_call.1} parent=1 // pred_check
      _
    $region7: #{tpu_custom_call.1} parent=1 // pred_check_branch
      %29 = sbr.rel (0) target = $region9
    $region8: #{tpu_custom_call.1} parent=1 // pred_region
      %s31 = ssub.s32 128, 128
      %32 = vsyncadd [#allocation7], %s31
      %s34 = sshll.u32 [#allocation6], 4
      %s35 = int_to_ptr.vmem [resolvable:$true] %s34
      %37 = dma.hbm_to_vmem [thread:$0]  %s1, 128, %s35, [#allocation7]
    $region9: #{tpu_custom_call.1} parent=1 // pred_fallthru
      _
    // Predicated region
    $region10: #{tpu_custom_call.1} parent=1 // pred_check
      _
    $region11: #{tpu_custom_call.1} parent=1 // pred_check_branch
      %39 = sbr.rel (0) target = $region13
    $region12: #{tpu_custom_call.1} parent=1 // pred_region
      _
    $region13: #{tpu_custom_call.1} parent=1 // pred_fallthru
      _
    // Predicated region
    $region14: #{tpu_custom_call.1} parent=1 // pred_check
      _
    $region15: #{tpu_custom_call.1} parent=1 // pred_check_branch
      %41 = sbr.rel (0) target = $region17
    $region16: #{tpu_custom_call.1} parent=1 // pred_region
      %s43 = ssub.s32 512, 512
      %44 = vsyncadd [#allocation7], %s43
      %s45 = sshll.u32 [#allocation8], 4
      %s46 = int_to_ptr.vmem [resolvable:$true] %s45
      %51 = dma.hbm_to_vmem [thread:$0]  %s3, 512, %s46, [#allocation7], 256, 256, 16
    $region17: #{tpu_custom_call.1} parent=1 // pred_fallthru
      _
    // Predicated region
    $region18: #{tpu_custom_call.1} parent=1 // pred_check
      _
    $region19: #{tpu_custom_call.1} parent=1 // pred_check_branch
      %53 = sbr.rel (0) target = $region21
    $region20: #{tpu_custom_call.1} parent=1 // pred_region
      %s55 = ssub.s32 512, 512
      %56 = vsyncadd [#allocation10], %s55
      %s57 = sshll.u32 [#allocation9], 4
      %s58 = int_to_ptr.vmem [resolvable:$true] %s57
      %63 = dma.hbm_to_vmem [thread:$0]  %s4, 512, %s58, [#allocation10], 256, 256, 16
    $region21: #{tpu_custom_call.1} parent=1 // pred_fallthru
      _
    // Predicated region
    $region22: #{tpu_custom_call.1} parent=1 // pred_check
      _
    $region23: #{tpu_custom_call.1} parent=1 // pred_check_branch
      %65 = sbr.rel (0) target = $region25
    $region24: #{tpu_custom_call.1} parent=1 // pred_region
      %66 = dma.done [#allocation4], 128
    $region25: #{tpu_custom_call.1} parent=1 // pred_fallthru
      _
    // Predicated region
    $region26: #{tpu_custom_call.1} parent=1 // pred_check
      _
    $region27: #{tpu_custom_call.1} parent=1 // pred_check_branch
      %68 = sbr.rel (0) target = $region29
    $region28: #{tpu_custom_call.1} parent=1 // pred_region
      %69 = dma.done [#allocation7], 128
    $region29: #{tpu_custom_call.1} parent=1 // pred_fallthru
      _
    // Predicated region
    $region30: #{tpu_custom_call.1} parent=1 // pred_check
      _
    $region31: #{tpu_custom_call.1} parent=1 // pred_check_branch
      %71 = sbr.rel (0) target = $region33
    $region32: #{tpu_custom_call.1} parent=1 // pred_region
      %72 = dma.done [#allocation7], 512
    $region33: #{tpu_custom_call.1} parent=1 // pred_fallthru
      _
    // Predicated region
    $region34: #{tpu_custom_call.1} parent=1 // pred_check
      _
    $region35: #{tpu_custom_call.1} parent=1 // pred_check_branch
      %74 = sbr.rel (0) target = $region37
    $region36: #{tpu_custom_call.1} parent=1 // pred_region
      %75 = dma.done [#allocation10], 512
    $region37: #{tpu_custom_call.1} parent=1 // pred_fallthru
      _
    %v77 = vld [vmem:[#allocation3] sm:$0xff]
    %v78 = vld [vmem:[#allocation6] sm:$0xff]
    %s79 = sld [smem:[#allocation2]]
    %v80 = vld [vmem:[#allocation8] sm:$0xff]
    %v81 = vld [vmem:[#allocation8 + $0x8] sm:$0xff]
    %v82 = vld [vmem:[#allocation8 + $0x10] sm:$0xff]
    %v83 = vld [vmem:[#allocation8 + $0x18] sm:$0xff]
    %v84 = vpack.c.bf16 %v82, %v80
    %v85 = vpack.c.bf16 %v83, %v81
    %v86 = vunpack.c.l.bf16 %v84
    %v87 = vunpack.c.l.bf16 %v85
    %v88 = vunpack.c.h.bf16 %v84
    %v89 = vunpack.c.h.bf16 %v85
    %v90 = vsub.f32 %v80, %v86
    %v91 = vsub.f32 %v81, %v87
    %v92 = vsub.f32 %v82, %v88
    %v93 = vsub.f32 %v83, %v89
    %v94 = vpack.c.bf16 %v92, %v90
    %v95 = vpack.c.bf16 %v93, %v91
    %v97 = vunpack.c.l.b16 %v78
    %v98 = vunpack.c.h.b16 %v78
    %v99 = vpack.c.b16 %v97, %v97
    %v100 = vpack.c.b16 %v98, %v98
    %103 = vmatprep.subr.bf16.mxu0 %v85
    %104 = vmatpush1.bf16.xpose.msra.mxu0 %v84
    %105 = vmatprep.subr.bf16.mxu0 0
    %106 = vmatpush1.bf16.xpose.msra.mxu0 0
    %107 = vmatprep.subr.bf16.mxu0 0
    %108 = vmatpush1.bf16.xpose.msra.mxu0 0
    %109 = vmatprep.subr.bf16.mxu0 0
    %110 = vmatpush1.bf16.xpose.msra.mxu0 0
    %111 = vmatprep.subr.bf16.mxu0 0
    %112 = vmatpush1.bf16.xpose.msra.mxu0 0
    %113 = vmatprep.subr.bf16.mxu0 0
    %114 = vmatpush1.bf16.xpose.msra.mxu0 0
    %115 = vmatprep.subr.bf16.mxu0 0
    %116 = vmatpush1.bf16.xpose.msra.mxu0 0
    %117 = vmatprep.subr.bf16.mxu0 0
    %118 = vmatpush1.bf16.xpose.msra.mxu0 0
    %119 = vmatprep.subr.bf16.mxu0 0
    %120 = vmatpush1.bf16.xpose.msra.mxu0 0
    %121 = vmatprep.subr.bf16.mxu0 0
    %122 = vmatpush1.bf16.xpose.msra.mxu0 0
    %123 = vmatprep.subr.bf16.mxu0 0
    %124 = vmatpush1.bf16.xpose.msra.mxu0 0
    %125 = vmatprep.subr.bf16.mxu0 0
    %126 = vmatpush1.bf16.xpose.msra.mxu0 0
    %127 = vmatprep.subr.bf16.mxu0 0
    %128 = vmatpush1.bf16.xpose.msra.mxu0 0
    %129 = vmatprep.subr.bf16.mxu0 0
    %130 = vmatpush1.bf16.xpose.msra.mxu0 0
    %131 = vmatprep.subr.bf16.mxu0 0
    %132 = vmatpush1.bf16.xpose.msra.mxu0 0
    %133 = vmatprep.subr.bf16.mxu0 0
    %134 = vmatpush1.bf16.xpose.msra.mxu0 0
    %135 = vmatprep.mubr.bf16.mxu0 %v100
    %136 = vmatmul.mubr.bf16.gmra.mrb[0].mxu0 %v99
    %v137 = vpop.f32.mrb[0].mxu0
    %v138 = vadd.f32 0.0, %v137
    %v139 = vpop.f32.mrb[0].mxu0
    %v140 = vpop.f32.mrb[0].mxu0
    %v141 = vpop.f32.mrb[0].mxu0
    %142 = vdwg.mxu0
    %v144 = vunpack.c.l.b16 %v77
    %v145 = vunpack.c.h.b16 %v77
    %v146 = vpack.c.b16 %v144, %v144
    %v147 = vpack.c.b16 %v145, %v145
    %150 = vmatprep.subr.bf16.mxu0 %v85
    %151 = vmatpush1.bf16.xpose.msra.mxu0 %v84
    %152 = vmatprep.subr.bf16.mxu0 0
    %153 = vmatpush1.bf16.xpose.msra.mxu0 0
    %154 = vmatprep.subr.bf16.mxu0 0
    %155 = vmatpush1.bf16.xpose.msra.mxu0 0
    %156 = vmatprep.subr.bf16.mxu0 0
    %157 = vmatpush1.bf16.xpose.msra.mxu0 0
    %158 = vmatprep.subr.bf16.mxu0 0
    %159 = vmatpush1.bf16.xpose.msra.mxu0 0
    %160 = vmatprep.subr.bf16.mxu0 0
    %161 = vmatpush1.bf16.xpose.msra.mxu0 0
    %162 = vmatprep.subr.bf16.mxu0 0
    %163 = vmatpush1.bf16.xpose.msra.mxu0 0
    %164 = vmatprep.subr.bf16.mxu0 0
    %165 = vmatpush1.bf16.xpose.msra.mxu0 0
    %166 = vmatprep.subr.bf16.mxu0 0
    %167 = vmatpush1.bf16.xpose.msra.mxu0 0
    %168 = vmatprep.subr.bf16.mxu0 0
    %169 = vmatpush1.bf16.xpose.msra.mxu0 0
    %170 = vmatprep.subr.bf16.mxu0 0
    %171 = vmatpush1.bf16.xpose.msra.mxu0 0
    %172 = vmatprep.subr.bf16.mxu0 0
    %173 = vmatpush1.bf16.xpose.msra.mxu0 0
    %174 = vmatprep.subr.bf16.mxu0 0
    %175 = vmatpush1.bf16.xpose.msra.mxu0 0
    %176 = vmatprep.subr.bf16.mxu0 0
    %177 = vmatpush1.bf16.xpose.msra.mxu0 0
    %178 = vmatprep.subr.bf16.mxu0 0
    %179 = vmatpush1.bf16.xpose.msra.mxu0 0
    %180 = vmatprep.subr.bf16.mxu0 0
    %181 = vmatpush1.bf16.xpose.msra.mxu0 0
    %182 = vmatprep.mubr.bf16.mxu0 %v147
    %183 = vmatmul.mubr.bf16.gmra.mrb[0].mxu0 %v146
    %v184 = vpop.f32.mrb[0].mxu0
    %v185 = vadd.f32 %v138, %v184
    %v186 = vpop.f32.mrb[0].mxu0
    %v187 = vpop.f32.mrb[0].mxu0
    %v188 = vpop.f32.mrb[0].mxu0
    %189 = vdwg.mxu0
    %190 = vmatprep.subr.bf16.mxu0 %v95
    %191 = vmatpush1.bf16.xpose.msra.mxu0 %v94
    %192 = vmatprep.subr.bf16.mxu0 0
    %193 = vmatpush1.bf16.xpose.msra.mxu0 0
    %194 = vmatprep.subr.bf16.mxu0 0
    %195 = vmatpush1.bf16.xpose.msra.mxu0 0
    %196 = vmatprep.subr.bf16.mxu0 0
    %197 = vmatpush1.bf16.xpose.msra.mxu0 0
    %198 = vmatprep.subr.bf16.mxu0 0
    %199 = vmatpush1.bf16.xpose.msra.mxu0 0
    %200 = vmatprep.subr.bf16.mxu0 0
    %201 = vmatpush1.bf16.xpose.msra.mxu0 0
    %202 = vmatprep.subr.bf16.mxu0 0
    %203 = vmatpush1.bf16.xpose.msra.mxu0 0
    %204 = vmatprep.subr.bf16.mxu0 0
    %205 = vmatpush1.bf16.xpose.msra.mxu0 0
    %206 = vmatprep.subr.bf16.mxu0 0
    %207 = vmatpush1.bf16.xpose.msra.mxu0 0
    %208 = vmatprep.subr.bf16.mxu0 0
    %209 = vmatpush1.bf16.xpose.msra.mxu0 0
    %210 = vmatprep.subr.bf16.mxu0 0
    %211 = vmatpush1.bf16.xpose.msra.mxu0 0
    %212 = vmatprep.subr.bf16.mxu0 0
    %213 = vmatpush1.bf16.xpose.msra.mxu0 0
    %214 = vmatprep.subr.bf16.mxu0 0
    %215 = vmatpush1.bf16.xpose.msra.mxu0 0
    %216 = vmatprep.subr.bf16.mxu0 0
    %217 = vmatpush1.bf16.xpose.msra.mxu0 0
    %218 = vmatprep.subr.bf16.mxu0 0
    %219 = vmatpush1.bf16.xpose.msra.mxu0 0
    %220 = vmatprep.subr.bf16.mxu0 0
    %221 = vmatpush1.bf16.xpose.msra.mxu0 0
    %222 = vmatprep.mubr.bf16.mxu0 %v147
    %223 = vmatmul.mubr.bf16.gmra.mrb[0].mxu0 %v146
    %v224 = vpop.f32.mrb[0].mxu0
    %v225 = vadd.f32 0.0, %v224
    %v226 = vpop.f32.mrb[0].mxu0
    %v227 = vpop.f32.mrb[0].mxu0
    %v228 = vpop.f32.mrb[0].mxu0
    %229 = vdwg.mxu0
    %v230 = vadd.f32 %v185, %v225
    %v231 = vstv %s79
    %v232 = vadd.f32 %v230, %v231
    %v233 = vxor.u32 %v232, 2147483648
    %v234 = vmul.f32 %v233, 1.442695
    %v235 = vpow.pop %v234
    %v236 = vadd.f32 %v235, 1.0
    %v237 = vrcp.pop %v236
    %v238 = vmul.f32 1.0, %v237
    %vm239 = vcmask 122880
    %240 = vst.msk [vmem:[#allocation11] sm:$0x1] %vm239, %v238
    %v241 = vld [vmem:[#allocation9] sm:$0xff]
    %v242 = vld [vmem:[#allocation9 + $0x8] sm:$0xff]
    %v243 = vld [vmem:[#allocation9 + $0x10] sm:$0xff]
    %v244 = vld [vmem:[#allocation9 + $0x18] sm:$0xff]
    %v245 = vpack.c.bf16 %v243, %v241
    %v246 = vpack.c.bf16 %v244, %v242
    %v247 = vunpack.c.l.bf16 %v245
    %v248 = vunpack.c.l.bf16 %v246
    %v249 = vunpack.c.h.bf16 %v245
    %v250 = vunpack.c.h.bf16 %v246
    %v251 = vsub.f32 %v241, %v247
    %v252 = vsub.f32 %v242, %v248
    %v253 = vsub.f32 %v243, %v249
    %v254 = vsub.f32 %v244, %v250
    %v255 = vpack.c.bf16 %v253, %v251
    %v256 = vpack.c.bf16 %v254, %v252
    %257 = vmatprep.subr.bf16.mxu0 %v246
    %258 = vmatpush1.bf16.xpose.msra.mxu0 %v245
    %259 = vmatprep.subr.bf16.mxu0 0
    %260 = vmatpush1.bf16.xpose.msra.mxu0 0
    %261 = vmatprep.subr.bf16.mxu0 0
    %262 = vmatpush1.bf16.xpose.msra.mxu0 0
    %263 = vmatprep.subr.bf16.mxu0 0
    %264 = vmatpush1.bf16.xpose.msra.mxu0 0
    %265 = vmatprep.subr.bf16.mxu0 0
    %266 = vmatpush1.bf16.xpose.msra.mxu0 0
    %267 = vmatprep.subr.bf16.mxu0 0
    %268 = vmatpush1.bf16.xpose.msra.mxu0 0
    %269 = vmatprep.subr.bf16.mxu0 0
    %270 = vmatpush1.bf16.xpose.msra.mxu0 0
    %271 = vmatprep.subr.bf16.mxu0 0
    %272 = vmatpush1.bf16.xpose.msra.mxu0 0
    %273 = vmatprep.subr.bf16.mxu0 0
    %274 = vmatpush1.bf16.xpose.msra.mxu0 0
    %275 = vmatprep.subr.bf16.mxu0 0
    %276 = vmatpush1.bf16.xpose.msra.mxu0 0
    %277 = vmatprep.subr.bf16.mxu0 0
    %278 = vmatpush1.bf16.xpose.msra.mxu0 0
    %279 = vmatprep.subr.bf16.mxu0 0
    %280 = vmatpush1.bf16.xpose.msra.mxu0 0
    %281 = vmatprep.subr.bf16.mxu0 0
    %282 = vmatpush1.bf16.xpose.msra.mxu0 0
    %283 = vmatprep.subr.bf16.mxu0 0
    %284 = vmatpush1.bf16.xpose.msra.mxu0 0
    %285 = vmatprep.subr.bf16.mxu0 0
    %286 = vmatpush1.bf16.xpose.msra.mxu0 0
    %287 = vmatprep.subr.bf16.mxu0 0
    %288 = vmatpush1.bf16.xpose.msra.mxu0 0
    %289 = vmatprep.mubr.bf16.mxu0 %v100
    %290 = vmatmul.mubr.bf16.gmra.mrb[0].mxu0 %v99
    %v291 = vpop.f32.mrb[0].mxu0
    %v292 = vadd.f32 0.0, %v291
    %v293 = vpop.f32.mrb[0].mxu0
    %v294 = vpop.f32.mrb[0].mxu0
    %v295 = vpop.f32.mrb[0].mxu0
    %296 = vdwg.mxu0
    %297 = vmatprep.subr.bf16.mxu0 %v246
    %298 = vmatpush1.bf16.xpose.msra.mxu0 %v245
    %299 = vmatprep.subr.bf16.mxu0 0
    %300 = vmatpush1.bf16.xpose.msra.mxu0 0
    %301 = vmatprep.subr.bf16.mxu0 0
    %302 = vmatpush1.bf16.xpose.msra.mxu0 0
    %303 = vmatprep.subr.bf16.mxu0 0
    %304 = vmatpush1.bf16.xpose.msra.mxu0 0
    %305 = vmatprep.subr.bf16.mxu0 0
    %306 = vmatpush1.bf16.xpose.msra.mxu0 0
    %307 = vmatprep.subr.bf16.mxu0 0
    %308 = vmatpush1.bf16.xpose.msra.mxu0 0
    %309 = vmatprep.subr.bf16.mxu0 0
    %310 = vmatpush1.bf16.xpose.msra.mxu0 0
    %311 = vmatprep.subr.bf16.mxu0 0
    %312 = vmatpush1.bf16.xpose.msra.mxu0 0
    %313 = vmatprep.subr.bf16.mxu0 0
    %314 = vmatpush1.bf16.xpose.msra.mxu0 0
    %315 = vmatprep.subr.bf16.mxu0 0
    %316 = vmatpush1.bf16.xpose.msra.mxu0 0
    %317 = vmatprep.subr.bf16.mxu0 0
    %318 = vmatpush1.bf16.xpose.msra.mxu0 0
    %319 = vmatprep.subr.bf16.mxu0 0
    %320 = vmatpush1.bf16.xpose.msra.mxu0 0
    %321 = vmatprep.subr.bf16.mxu0 0
    %322 = vmatpush1.bf16.xpose.msra.mxu0 0
    %323 = vmatprep.subr.bf16.mxu0 0
    %324 = vmatpush1.bf16.xpose.msra.mxu0 0
    %325 = vmatprep.subr.bf16.mxu0 0
    %326 = vmatpush1.bf16.xpose.msra.mxu0 0
    %327 = vmatprep.subr.bf16.mxu0 0
    %328 = vmatpush1.bf16.xpose.msra.mxu0 0
    %329 = vmatprep.mubr.bf16.mxu0 %v147
    %330 = vmatmul.mubr.bf16.gmra.mrb[0].mxu0 %v146
    %v331 = vpop.f32.mrb[0].mxu0
    %v332 = vadd.f32 %v292, %v331
    %v333 = vpop.f32.mrb[0].mxu0
    %v334 = vpop.f32.mrb[0].mxu0
    %v335 = vpop.f32.mrb[0].mxu0
    %336 = vdwg.mxu0
    %337 = vmatprep.subr.bf16.mxu0 %v256
    %338 = vmatpush1.bf16.xpose.msra.mxu0 %v255
    %339 = vmatprep.subr.bf16.mxu0 0
    %340 = vmatpush1.bf16.xpose.msra.mxu0 0
    %341 = vmatprep.subr.bf16.mxu0 0
    %342 = vmatpush1.bf16.xpose.msra.mxu0 0
    %343 = vmatprep.subr.bf16.mxu0 0
    %344 = vmatpush1.bf16.xpose.msra.mxu0 0
    %345 = vmatprep.subr.bf16.mxu0 0
    %346 = vmatpush1.bf16.xpose.msra.mxu0 0
    %347 = vmatprep.subr.bf16.mxu0 0
    %348 = vmatpush1.bf16.xpose.msra.mxu0 0
    %349 = vmatprep.subr.bf16.mxu0 0
    %350 = vmatpush1.bf16.xpose.msra.mxu0 0
    %351 = vmatprep.subr.bf16.mxu0 0
    %352 = vmatpush1.bf16.xpose.msra.mxu0 0
    %353 = vmatprep.subr.bf16.mxu0 0
    %354 = vmatpush1.bf16.xpose.msra.mxu0 0
    %355 = vmatprep.subr.bf16.mxu0 0
    %356 = vmatpush1.bf16.xpose.msra.mxu0 0
    %357 = vmatprep.subr.bf16.mxu0 0
    %358 = vmatpush1.bf16.xpose.msra.mxu0 0
    %359 = vmatprep.subr.bf16.mxu0 0
    %360 = vmatpush1.bf16.xpose.msra.mxu0 0
    %361 = vmatprep.subr.bf16.mxu0 0
    %362 = vmatpush1.bf16.xpose.msra.mxu0 0
    %363 = vmatprep.subr.bf16.mxu0 0
    %364 = vmatpush1.bf16.xpose.msra.mxu0 0
    %365 = vmatprep.subr.bf16.mxu0 0
    %366 = vmatpush1.bf16.xpose.msra.mxu0 0
    %367 = vmatprep.subr.bf16.mxu0 0
    %368 = vmatpush1.bf16.xpose.msra.mxu0 0
    %369 = vmatprep.mubr.bf16.mxu0 %v147
    %370 = vmatmul.mubr.bf16.gmra.mrb[0].mxu0 %v146
    %v371 = vpop.f32.mrb[0].mxu0
    %v372 = vadd.f32 0.0, %v371
    %v373 = vpop.f32.mrb[0].mxu0
    %v374 = vpop.f32.mrb[0].mxu0
    %v375 = vpop.f32.mrb[0].mxu0
    %376 = vdwg.mxu0
    %v377 = vadd.f32 %v332, %v372
    %v378 = vadd.f32 %v377, %v231
    %v379 = vxor.u32 %v378, 2147483648
    %v380 = vmul.f32 %v379, 1.442695
    %v381 = vpow.pop %v380
    %v382 = vadd.f32 %v381, 1.0
    %v383 = vrcp.pop %v382
    %v384 = vmul.f32 1.0, %v383
    %385 = vst.msk [vmem:[#allocation12] sm:$0x1] %vm239, %v384
    // Predicated region
    $region38: #{tpu_custom_call.1} parent=1 // pred_check
      _
    $region39: #{tpu_custom_call.1} parent=1 // pred_check_branch
      %387 = sbr.rel (0) target = $region41
    $region40: #{tpu_custom_call.1} parent=1 // pred_region
      %s389 = ssub.s32 16, 16
      %390 = vsyncadd [#allocation5], %s389
      %s392 = sshll.u32 [#allocation11], 4
      %s393 = int_to_ptr.vmem [resolvable:$true] %s392
      %395 = dma.vmem_to_hbm [thread:$0]  %s393, 16, %s5, [#allocation5]
    $region41: #{tpu_custom_call.1} parent=1 // pred_fallthru
      _
    // Predicated region
    $region42: #{tpu_custom_call.1} parent=1 // pred_check
      _
    $region43: #{tpu_custom_call.1} parent=1 // pred_check_branch
      %397 = sbr.rel (0) target = $region45
    $region44: #{tpu_custom_call.1} parent=1 // pred_region
      %s399 = ssub.s32 16, 16
      %400 = vsyncadd [#allocation13], %s399
      %s402 = sshll.u32 [#allocation12], 4
      %s403 = int_to_ptr.vmem [resolvable:$true] %s402
      %405 = dma.vmem_to_hbm [thread:$0]  %s403, 16, %s6, [#allocation13]
    $region45: #{tpu_custom_call.1} parent=1 // pred_fallthru
      _
    // Predicated region
    $region46: #{tpu_custom_call.1} parent=1 // pred_check
      _
    $region47: #{tpu_custom_call.1} parent=1 // pred_check_branch
      %407 = sbr.rel (0) target = $region49
    $region48: #{tpu_custom_call.1} parent=1 // pred_region
      %408 = dma.done [#allocation5], 16
    $region49: #{tpu_custom_call.1} parent=1 // pred_fallthru
      _
    // Predicated region
    $region50: #{tpu_custom_call.1} parent=1 // pred_check
      _
    $region51: #{tpu_custom_call.1} parent=1 // pred_check_branch
      %410 = sbr.rel (0) target = $region53
    $region52: #{tpu_custom_call.1} parent=1 // pred_region
      %411 = dma.done [#allocation13], 16
    $region53: #{tpu_custom_call.1} parent=1 // pred_fallthru
      _
    %412 = vsyncpa [#allocation4], 1
    %413 = vsyncpa [#allocation7], 1
    %414 = vsyncpa [#allocation10], 1
    %415 = vsyncpa [#allocation5], 1
    %416 = vsyncpa [#allocation13], 1

</llo_original>
